<compile_context>
chip_gen: v6e
topology: v6e:2x2x1
jax: 0.10.0
libtpu: 0.0.40
codegen_flags: <defaults>
</compile_context>

<pallas_src>
import jax
import jax.numpy as jnp
from jax.experimental import pallas as pl
from jax.experimental.pallas import tpu as pltpu

_LANES = 128


def _lecun_kernel(x_ref, o_ref):
    # VPU mul + EUP tanh + VPU scale; explicit f32 compute path.
    x = x_ref[...].astype(jnp.float32)
    y = 1.7159 * jnp.tanh(0.666 * x)
    o_ref[...] = y.astype(o_ref.dtype)


def _sublane_min(dtype) -> int:
    itemsize = jnp.dtype(dtype).itemsize
    return {4: 8, 2: 16, 1: 32}.get(itemsize, 8)


def lecun(x: jax.Array, *, target_block_rows: int = 4096) -> jax.Array:
    """Apply 1.7159 * tanh(0.666 * x) elementwise via a Pallas TPU kernel."""
    orig_shape = x.shape
    dtype = x.dtype
    total = x.size
    if total == 0:
        return x

    sub_min = _sublane_min(dtype)

    # Rows of a lane-dense (rows, 128) slab needed to hold all elements.
    rows_needed = -(-total // _LANES)

    # Pick the row-tile:
    #  * large inputs: fixed 4096-row tile (2 MiB for f32) -> near HBM roofline,
    #    multiple of 32 so it is legal for every dtype's sublane packing.
    #  * small inputs: one tile rounded up to the dtype's sublane minimum.
    if rows_needed >= target_block_rows:
        tile_rows = target_block_rows
    else:
        tile_rows = ((rows_needed + sub_min - 1) // sub_min) * sub_min

    # Pad the ROW COUNT up to a multiple of the tile (never shrink the tile).
    padded_rows = (-(-rows_needed // tile_rows)) * tile_rows
    padded_total = padded_rows * _LANES

    flat = jnp.ravel(x)
    needs_pad = padded_total != total
    if needs_pad:
        # Only pay the extra HBM pass when the flat size is ragged.
        # TODO(synk): handle the ragged tail with a masked in-kernel store
        # instead of a full pad+slice to avoid the extra copies entirely.
        flat = jnp.pad(flat, (0, padded_total - total))

    x2d = flat.reshape(padded_rows, _LANES)
    grid = (padded_rows // tile_rows,)

    out2d = pl.pallas_call(
        _lecun_kernel,
        out_shape=jax.ShapeDtypeStruct((padded_rows, _LANES), dtype),
        grid_spec=pltpu.PrefetchScalarGridSpec(
            num_scalar_prefetch=0,
            grid=grid,
            in_specs=[pl.BlockSpec((tile_rows, _LANES), lambda i: (i, 0))],
            out_specs=pl.BlockSpec((tile_rows, _LANES), lambda i: (i, 0)),
        ),
        compiler_params=pltpu.CompilerParams(
            dimension_semantics=("parallel",),
        ),
    )(x2d)

    out_flat = out2d.reshape(-1)
    if needs_pad:
        out_flat = out_flat[:total]
    return out_flat.reshape(orig_shape)


def _ref(x):
    return (1.7159 * jnp.tanh(0.666 * x.astype(jnp.float32))).astype(x.dtype)


if __name__ == "__main__":
    key = jax.random.PRNGKey(0)
    k0, k1, k2 = jax.random.split(key, 3)

    # Primary case: small NCHW-like input, divides cleanly (no pad/slice path).
    x = jax.random.normal(k0, (2, 4, 16, 16), dtype=jnp.float32)
    y = jax.block_until_ready(lecun(x))
    assert y.shape == x.shape and y.dtype == x.dtype
    assert jnp.allclose(y, _ref(x), atol=1e-6, rtol=1e-6)

    # Ragged case: exercises the pad + tail-slice path.
    xr = jax.random.normal(k1, (3, 5, 7), dtype=jnp.float32)
    yr = jax.block_until_ready(lecun(xr))
    assert yr.shape == xr.shape and yr.dtype == xr.dtype
    assert jnp.allclose(yr, _ref(xr), atol=1e-6, rtol=1e-6)

    # bf16 case: exercises the f32-compute / dtype sublane-minimum path.
    xb = jax.random.normal(k2, (2, 4, 16, 16), dtype=jnp.bfloat16)
    yb = jax.block_until_ready(lecun(xb))
    assert yb.shape == xb.shape and yb.dtype == xb.dtype
    assert jnp.allclose(yb.astype(jnp.float32), _ref(xb).astype(jnp.float32),
                        atol=2e-2, rtol=2e-2)

    print("KERNEL_OK")
</pallas_src>

<mosaic_0001>
module attributes {stable_mosaic.version = 11 : i64} {
  func.func @_lecun_kernel(%arg0: i32, %arg1: memref<16x128xf32, #tpu.memory_space<vmem>>, %arg2: memref<16x128xf32, #tpu.memory_space<vmem>>) attributes {dimension_semantics = [#tpu.dimension_semantics<parallel>], iteration_bounds = array<i64: 1>, scalar_prefetch = 0 : i64, scratch_operands = 0 : i64, tpu.core_type = #tpu.core_type<tc>, window_params = [{transform_indices = @transform_0, window_bounds = array<i64: 16, 128>}, {transform_indices = @transform_1, window_bounds = array<i64: 16, 128>}]} {
    %c0 = arith.constant 0 : index
    %c0_0 = arith.constant 0 : index
    %0 = vector.load %arg1[%c0, %c0_0] : memref<16x128xf32, #tpu.memory_space<vmem>>, vector<16x128xf32>
    %cst = arith.constant 6.660000e-01 : f32
    %1 = vector.broadcast %cst : f32 to vector<16x128xf32>
    %2 = arith.mulf %1, %0 : vector<16x128xf32>
    %3 = math.tanh %2 : vector<16x128xf32>
    %cst_1 = arith.constant 1.715900e+00 : f32
    %4 = vector.broadcast %cst_1 : f32 to vector<16x128xf32>
    %5 = arith.mulf %4, %3 : vector<16x128xf32>
    %c0_2 = arith.constant 0 : index
    %c0_3 = arith.constant 0 : index
    %6 = vector.load %arg2[%c0_2, %c0_3] : memref<16x128xf32, #tpu.memory_space<vmem>>, vector<16x128xf32>
    tpu.vector_store %arg2[%c0_2, %c0_3], %5 {strides = array<i32>} : memref<16x128xf32, #tpu.memory_space<vmem>>, vector<16x128xf32>,
    return
  }
  func.func @transform_0(%arg0: i32) -> (i32, i32) {
    %c0_i32 = arith.constant 0 : i32
    %c0_i32_0 = arith.constant 0 : i32
    return %arg0, %c0_i32 : i32, i32
  }
  func.func @transform_1(%arg0: i32) -> (i32, i32) {
    %c0_i32 = arith.constant 0 : i32
    %c0_i32_0 = arith.constant 0 : i32
    return %arg0, %c0_i32 : i32, i32
  }
}

</mosaic_0001>

<llo_original>
// kernel: tpu_custom_call.1
$region0: #{tpu_custom_call.1}
  #allocation0 [shape = 'u32[]', space=smem, size = 0x4, offset = 0x4, fixed_abs, tag = 'smem constant byte address 0x4 - core index']
  #allocation1 [shape = 'u32[144,128]{1,0:T(1,128)}', space=vmem, size = 0x12000, scoped, tag = 'internal scratch']
  %s0 = inlined_call_operand.hbm [shape: f32[16,128], index: 0, kind: input, shape index: {}]
  %s1 = inlined_call_operand.hbm [shape: f32[16,128], index: 1, kind: output, shape index: {}]
  %s2 = sld [smem:[#allocation0]]
  $region18: #{tpu_custom_call.1} parent=0
    _
  %s4 = ssub.s32 1, %s2
  %s5 = scalar_select 0, %s4, %s2
  $region1: #{tpu_custom_call.1} parent=0
    #allocation2 [shape = 'u8[8192]{0}', space=vmem, size = 0x2000, scoped, tag = 'input window, operand 0, single buffered']
    #allocation3 [shape = 's32[1]{0}', space=sflag, size = 0x4, scoped, tag = 'scoped memory for tpu_custom_call.1']
    #allocation4 [shape = 's32[1]{0}', space=sflag, size = 0x4, scoped, tag = 'scoped memory for tpu_custom_call.1']
    #allocation5 [shape = 'u8[8192]{0}', space=vmem, size = 0x2000, scoped, tag = 'output window, operand 0, single buffered']
    %6 = vsyncpa [#allocation3], 0
    %7 = vsyncpa [#allocation4], 0
    // Predicated region
    $region2: #{tpu_custom_call.1} parent=1 // pred_check
      _
    $region3: #{tpu_custom_call.1} parent=1 // pred_check_branch
      %9 = sbr.rel (0) target = $region5
    $region4: #{tpu_custom_call.1} parent=1 // pred_region
      %s11 = ssub.s32 256, 256
      %12 = vsyncadd [#allocation3], %s11
      %s13 = sshll.u32 [#allocation2], 4
      %s14 = int_to_ptr.vmem [resolvable:$true] %s13
      %19 = dma.hbm_to_vmem [thread:$0]  %s0, 256, %s14, [#allocation3], 128, 128, 8
    $region5: #{tpu_custom_call.1} parent=1 // pred_fallthru
      _
    // Predicated region
    $region6: #{tpu_custom_call.1} parent=1 // pred_check
      _
    $region7: #{tpu_custom_call.1} parent=1 // pred_check_branch
      %21 = sbr.rel (0) target = $region9
    $region8: #{tpu_custom_call.1} parent=1 // pred_region
      %22 = dma.done [#allocation3], 256
    $region9: #{tpu_custom_call.1} parent=1 // pred_fallthru
      _
    %v23 = vld [vmem:[#allocation2] sm:$0xff]
    %v24 = vld [vmem:[#allocation2 + $0x8] sm:$0xff]
    %v25 = vmul.f32 %v23, 0.666
    %v26 = vmul.f32 %v24, 0.666
    %v27 = vtanh.pop %v25
    %v28 = vtanh.pop %v26
    %v29 = vmul.f32 %v27, 1.7159
    %v30 = vmul.f32 %v28, 1.7159
    %31 = vst [vmem:[#allocation5] sm:$0xff] %v29
    %32 = vst [vmem:[#allocation5 + $0x8] sm:$0xff] %v30
    // Predicated region
    $region10: #{tpu_custom_call.1} parent=1 // pred_check
      _
    $region11: #{tpu_custom_call.1} parent=1 // pred_check_branch
      %34 = sbr.rel (0) target = $region13
    $region12: #{tpu_custom_call.1} parent=1 // pred_region
      %s36 = ssub.s32 256, 256
      %37 = vsyncadd [#allocation4], %s36
      %s38 = sshll.u32 [#allocation5], 4
      %s39 = int_to_ptr.vmem [resolvable:$true] %s38
      %44 = dma.vmem_to_hbm [thread:$0]  %s39, 256, %s1, [#allocation4], 128, 128, 8
    $region13: #{tpu_custom_call.1} parent=1 // pred_fallthru
      _
    // Predicated region
    $region14: #{tpu_custom_call.1} parent=1 // pred_check
      _
    $region15: #{tpu_custom_call.1} parent=1 // pred_check_branch
      %46 = sbr.rel (0) target = $region17
    $region16: #{tpu_custom_call.1} parent=1 // pred_region
      %47 = dma.done [#allocation4], 256
    $region17: #{tpu_custom_call.1} parent=1 // pred_fallthru
      _
    %48 = vsyncpa [#allocation3], 1
    %49 = vsyncpa [#allocation4], 1

</llo_original>
